<compile_context>
chip_gen: v5e
topology: v5e:2x2
jax: 0.10.0
libtpu: 0.0.40
codegen_flags: <defaults>
</compile_context>

<pallas_src>
import functools
import math

import jax
import jax.numpy as jnp
from jax.experimental import pallas as pl
from jax.experimental.pallas import tpu as pltpu


_TARGET_BLOCK_BYTES = 4 * 1024 * 1024      # ~4 MiB per in/out buffer
_VMEM_LIMIT_BYTES = 48 * 1024 * 1024       # 2 in + 2 out, double-buffered, + headroom
_SUBLANE_BY_ITEMSIZE = {4: 8, 2: 16, 1: 32}


# ----------------------------------------------------------------------------
# Kernel bodies
# ----------------------------------------------------------------------------
def _lif_kernel(dv_ref, v_ref, spike_ref, v_next_ref, *,
                v_threshold, v_reset, reciprocal_tau):
    dv = dv_ref[...]
    v = v_ref[...]
    # charge -- same arithmetic order as the reference C++ op
    h = v + reciprocal_tau * (dv - v + v_reset)
    # fire + hard reset
    fired = h >= v_threshold
    spike_ref[...] = fired.astype(spike_ref.dtype)
    v_next_ref[...] = jnp.where(fired, jnp.asarray(v_reset, dtype=h.dtype), h)


def _lif_multi_kernel(x_ref, v0_ref, spike_ref, v_ref, *,
                      v_threshold, v_reset, reciprocal_tau):
    # grid = (row_blocks, T); v_ref's block index is constant along T, so the
    # membrane state stays resident in VMEM for the whole time loop and is
    # written back to HBM only once per row block.
    t = pl.program_id(1)

    @pl.when(t == 0)
    def _():
        v_ref[...] = v0_ref[...]

    v = v_ref[...]
    h = v + reciprocal_tau * (x_ref[...] - v + v_reset)
    fired = h >= v_threshold
    spike_ref[...] = fired.astype(spike_ref.dtype)
    v_ref[...] = jnp.where(fired, jnp.asarray(v_reset, dtype=h.dtype), h)


# ----------------------------------------------------------------------------
# Layout helpers: flatten to a lane-dense (rows, lanes) slab
# ----------------------------------------------------------------------------
def _choose_layout(n, dtype):
    """Return (lanes, rows, tile_r, grid_r) for n elements of dtype."""
    itemsize = jnp.dtype(dtype).itemsize
    sublane = _SUBLANE_BY_ITEMSIZE.get(itemsize, 8)

    # Only widen lanes beyond 128 if the resulting rows keep full sublane
    # occupancy (rows >= sublane); prefer exact divisors (zero-copy reshape).
    lanes = 128
    for cand in (2048, 1024, 512, 256, 128):
        if n % cand == 0 and (n // cand) >= sublane:
            lanes = cand
            break
    rows = -(-n // lanes)                                   # ceil

    bytes_per_row = lanes * itemsize
    max_block_rows = max(
        sublane, (_TARGET_BLOCK_BYTES // bytes_per_row) // sublane * sublane)

    if rows > max_block_rows:
        tile_r = max_block_rows
    elif rows >= 2 * sublane:
        # Split small/medium slabs into a few blocks so the "parallel" grid
        # axis can be sharded across v7x's two TensorCores.
        n_blocks = min(4, rows // sublane)
        tile_r = -(-rows // n_blocks)                       # ceil
        tile_r = -(-tile_r // sublane) * sublane            # dtype-aware round-up
    else:
        tile_r = rows      # single block == full array ((8,128) rule waived)

    grid_r = -(-rows // tile_r)
    return lanes, rows, tile_r, grid_r


def _to_slab(x, rows, lanes):
    flat = x.reshape(-1)
    pad = rows * lanes - flat.size
    if pad:
        flat = jnp.pad(flat, (0, pad))                      # < 1 row, rare path
    return flat.reshape(rows, lanes)


def _seq_to_slab(x_seq, rows, lanes):
    T = x_seq.shape[0]
    flat = x_seq.reshape(T, -1)
    pad = rows * lanes - flat.shape[1]
    if pad:
        flat = jnp.pad(flat, ((0, 0), (0, pad)))
    return flat.reshape(T, rows, lanes)


def _from_slab(slab, n, shape):
    flat = slab.reshape(-1)
    if flat.size != n:
        flat = flat[:n]
    return flat.reshape(shape)


def _seq_from_slab(slab, n, shape):
    T = slab.shape[0]
    flat = slab.reshape(T, -1)
    if flat.shape[1] != n:
        flat = flat[:, :n]
    return flat.reshape((T,) + tuple(shape))


# ----------------------------------------------------------------------------
# pallas_call builders (cached per layout / parameters)
# ----------------------------------------------------------------------------
@functools.lru_cache(maxsize=None)
def _get_lif_call(rows, lanes, tile_r, dtype, v_threshold, v_reset,
                  reciprocal_tau, donate_v):
    kernel = functools.partial(
        _lif_kernel,
        v_threshold=float(v_threshold),
        v_reset=float(v_reset),
        reciprocal_tau=float(reciprocal_tau),
    )
    grid_r = -(-rows // tile_r)                             # cdiv, partial tail masked
    block = pl.BlockSpec((tile_r, lanes), lambda i: (i, 0))
    call = pl.pallas_call(
        kernel,
        out_shape=(
            jax.ShapeDtypeStruct((rows, lanes), dtype),     # spike
            jax.ShapeDtypeStruct((rows, lanes), dtype),     # v_next
        ),
        grid_spec=pltpu.PrefetchScalarGridSpec(
            num_scalar_prefetch=0,
            grid=(grid_r,),
            in_specs=[block, block],
            out_specs=[block, block],
        ),
        compiler_params=pltpu.CompilerParams(
            dimension_semantics=("parallel",),
            vmem_limit_bytes=_VMEM_LIMIT_BYTES,
        ),
        # Update the membrane state in place when the caller owns the buffer.
        input_output_aliases=({1: 1} if donate_v else {}),
    )
    if donate_v:
        return jax.jit(call, donate_argnums=(1,))
    return jax.jit(call)


@functools.lru_cache(maxsize=None)
def _get_lif_multi_call(T, rows, lanes, tile_r, dtype, v_threshold, v_reset,
                        reciprocal_tau, donate_v):
    kernel = functools.partial(
        _lif_multi_kernel,
        v_threshold=float(v_threshold),
        v_reset=float(v_reset),
        reciprocal_tau=float(reciprocal_tau),
    )
    grid_r = -(-rows // tile_r)
    seq_block = pl.BlockSpec((None, tile_r, lanes), lambda i, t: (t, i, 0))
    v_block = pl.BlockSpec((tile_r, lanes), lambda i, t: (i, 0))
    call = pl.pallas_call(
        kernel,
        out_shape=(
            jax.ShapeDtypeStruct((T, rows, lanes), dtype),  # spikes, all steps
            jax.ShapeDtypeStruct((rows, lanes), dtype),     # final membrane v
        ),
        grid_spec=pltpu.PrefetchScalarGridSpec(
            num_scalar_prefetch=0,
            grid=(grid_r, T),
            in_specs=[seq_block, v_block],
            out_specs=[seq_block, v_block],
        ),
        compiler_params=pltpu.CompilerParams(
            dimension_semantics=("parallel", "arbitrary"),
            vmem_limit_bytes=_VMEM_LIMIT_BYTES,
        ),
        input_output_aliases=({1: 1} if donate_v else {}),
    )
    if donate_v:
        return jax.jit(call, donate_argnums=(1,))
    return jax.jit(call)


# ----------------------------------------------------------------------------
# Functional APIs
# ----------------------------------------------------------------------------
def lif_hard_reset_forward(dv, v, *, v_threshold=1.0, v_reset=0.0,
                           reciprocal_tau=0.01):
    """Single elementwise LIF step. Returns (spike, v_next), same shape as dv."""
    shape = tuple(dv.shape)
    n = dv.size
    dtype = jnp.dtype(dv.dtype)
    lanes, rows, tile_r, _ = _choose_layout(n, dtype)

    dv_slab = _to_slab(dv, rows, lanes)
    v_slab = _to_slab(v, rows, lanes)

    step = _get_lif_call(rows, lanes, tile_r, dtype, float(v_threshold),
                         float(v_reset), float(reciprocal_tau), donate_v=False)
    spike_slab, v_next_slab = step(dv_slab, v_slab)
    return _from_slab(spike_slab, n, shape), _from_slab(v_next_slab, n, shape)


def lif_hard_reset_multi_step(x_seq, v0, *, v_threshold=1.0, v_reset=0.0,
                              reciprocal_tau=0.01):
    """Fused T-step LIF. x_seq: [T, ...], v0: [...]. Returns (spikes[T,...], v_T)."""
    T = int(x_seq.shape[0])
    shape = tuple(x_seq.shape[1:])
    n = v0.size
    dtype = jnp.dtype(x_seq.dtype)
    lanes, rows, tile_r, _ = _choose_layout(n, dtype)

    x_slab = _seq_to_slab(x_seq, rows, lanes)
    v_slab = _to_slab(v0, rows, lanes)

    call = _get_lif_multi_call(T, rows, lanes, tile_r, dtype, float(v_threshold),
                               float(v_reset), float(reciprocal_tau),
                               donate_v=False)
    spike_slab, v_final_slab = call(x_slab, v_slab)
    return _seq_from_slab(spike_slab, n, shape), _from_slab(v_final_slab, n, shape)


# ----------------------------------------------------------------------------
# Stateful module mirroring spikingjelly.cext.neuron.LIFNode (inference path)
# ----------------------------------------------------------------------------
class LIFNode:
    """JAX mirror of spikingjelly.cext.neuron.LIFNode forward pass.

    `surrogate_function`, `alpha`, `detach_reset` only affect the backward
    pass of the original module; they are accepted for API parity.
    """
    # TODO(synk): surrogate-gradient backward (LIFStep.backward) not implemented.

    def __init__(self, tau=100.0, v_threshold=1.0, v_reset=0.0,
                 surrogate_function='ATan', alpha=2.0, detach_reset=False):
        self.v_threshold = v_threshold
        self.v_reset = v_reset
        self.surrogate_function = surrogate_function
        self.alpha = alpha
        self.detach_reset = detach_reset
        self.reciprocal_tau = 1.0 / tau
        self.reset()

    def reset(self):
        # Membrane state kept in the kernel slab layout between steps.
        self._v_slab = None
        self._sig = None
        self._shape = None
        self._n = None
        self._layout = None

    @property
    def v(self):
        if self._v_slab is None:
            return self.v_reset
        return _from_slab(self._v_slab, self._n, self._shape)

    def _ensure_state(self, shape, dtype):
        shape = tuple(int(s) for s in shape)
        dtype = jnp.dtype(dtype)
        n = math.prod(shape)
        sig = (shape, dtype)
        if self._v_slab is None or self._sig != sig:
            lanes, rows, tile_r, _ = _choose_layout(n, dtype)
            self._sig = sig
            self._shape = shape
            self._n = n
            self._layout = (lanes, rows, tile_r)
            self._v_slab = jnp.full((rows, lanes), self.v_reset, dtype)
        return self._layout

    def __call__(self, dv):
        if self.v_reset is None:
            raise NotImplementedError
        dtype = jnp.dtype(dv.dtype)
        lanes, rows, tile_r = self._ensure_state(dv.shape, dtype)
        dv_slab = _to_slab(dv, rows, lanes)
        step = _get_lif_call(rows, lanes, tile_r, dtype,
                             float(self.v_threshold), float(self.v_reset),
                             float(self.reciprocal_tau), donate_v=True)
        spike_slab, self._v_slab = step(dv_slab, self._v_slab)
        return _from_slab(spike_slab, self._n, self._shape)

    def forward_multi_step(self, x_seq):
        """Fused multi-timestep path: x_seq is [T, ...]; returns spikes [T, ...]."""
        if self.v_reset is None:
            raise NotImplementedError
        T = int(x_seq.shape[0])
        dtype = jnp.dtype(x_seq.dtype)
        lanes, rows, tile_r = self._ensure_state(x_seq.shape[1:], dtype)
        x_slab = _seq_to_slab(x_seq, rows, lanes)
        call = _get_lif_multi_call(T, rows, lanes, tile_r, dtype,
                                   float(self.v_threshold), float(self.v_reset),
                                   float(self.reciprocal_tau), donate_v=True)
        spike_slab, self._v_slab = call(x_slab, self._v_slab)
        return _seq_from_slab(spike_slab, self._n, self._shape)


# ----------------------------------------------------------------------------
# Pure-JAX reference (algebraic form from the C++ op)
# ----------------------------------------------------------------------------
def _reference_lif(dv, v, v_threshold, v_reset, reciprocal_tau):
    h = v + reciprocal_tau * (dv - v + v_reset)
    spike = (h >= v_threshold).astype(dv.dtype)
    v_next = spike * v_reset + (1.0 - spike) * h
    return spike, v_next


if __name__ == "__main__":
    key = jax.random.PRNGKey(0)
    k1, k2, k3 = jax.random.split(key, 3)

    # 1) NCHW input, stateful single-step x2 (module forward semantics).
    x = jax.random.normal(k1, (2, 4, 16, 16), dtype=jnp.float32) * 2.0
    node = LIFNode(tau=100.0, v_threshold=1.0, v_reset=0.0)
    spike1 = node(x)
    spike2 = node(x * 0.5)
    jax.block_until_ready(spike2)

    v_ref = jnp.zeros_like(x)
    s1_ref, v_ref = _reference_lif(x, v_ref, 1.0, 0.0, 0.01)
    s2_ref, v_ref = _reference_lif(x * 0.5, v_ref, 1.0, 0.0, 0.01)
    assert spike1.shape == x.shape and spike1.dtype == x.dtype
    assert jnp.allclose(spike1, s1_ref), "timestep 1 mismatch"
    assert jnp.allclose(spike2, s2_ref), "timestep 2 mismatch"
    assert jnp.allclose(node.v, v_ref, atol=1e-6), "membrane state mismatch"

    # 2) Non-zero v_reset + non-lane-aligned shape (flat-pad path, exact
    #    reference arithmetic order for the charge expression).
    y = jax.random.normal(k2, (3, 5, 7), dtype=jnp.float32)
    v0 = jnp.full_like(y, -0.2)
    s_k, v_k = lif_hard_reset_forward(y, v0, v_threshold=0.8, v_reset=-0.2,
                                      reciprocal_tau=0.5)
    s_r, v_r = _reference_lif(y, v0, 0.8, -0.2, 0.5)
    jax.block_until_ready(v_k)
    assert jnp.allclose(s_k, s_r), "ragged-shape spike mismatch"
    assert jnp.allclose(v_k, v_r, atol=1e-6), "ragged-shape v mismatch"

    # 3) rows not divisible by tile_r -> cdiv grid with a masked partial block.
    z = jax.random.normal(k3, (3, 11, 128), dtype=jnp.float32)
    vz = jnp.zeros_like(z)
    s_k, v_k = lif_hard_reset_forward(z, vz, v_threshold=0.5, v_reset=0.0,
                                      reciprocal_tau=0.1)
    s_r, v_r = _reference_lif(z, vz, 0.5, 0.0, 0.1)
    jax.block_until_ready(v_k)
    assert jnp.allclose(s_k, s_r), "partial-block spike mismatch"
    assert jnp.allclose(v_k, v_r, atol=1e-6), "partial-block v mismatch"

    # 4) Fused multi-timestep path (v resident in VMEM across T).
    T = 6
    xs = jax.random.normal(jax.random.PRNGKey(4), (T, 2, 4, 16, 16),
                           dtype=jnp.float32) * 1.5
    node2 = LIFNode(tau=2.0, v_threshold=1.0, v_reset=0.0)
    spikes_seq = node2.forward_multi_step(xs)
    jax.block_until_ready(spikes_seq)

    v_ref = jnp.zeros(xs.shape[1:], jnp.float32)
    for t in range(T):
        s_r, v_ref = _reference_lif(xs[t], v_ref, 1.0, 0.0, 0.5)
        assert jnp.allclose(spikes_seq[t], s_r), f"multi-step t={t} spike mismatch"
    assert jnp.allclose(node2.v, v_ref, atol=1e-6), "multi-step v mismatch"

    print("KERNEL_OK")
</pallas_src>

<mosaic_0001>
module attributes {stable_mosaic.version = 11 : i64} {
  func.func @_lif_kernel(%arg0: i32, %arg1: memref<8x256xf32, #tpu.memory_space<vmem>>, %arg2: memref<8x256xf32, #tpu.memory_space<vmem>>, %arg3: memref<8x256xf32, #tpu.memory_space<vmem>>, %arg4: memref<8x256xf32, #tpu.memory_space<vmem>>) attributes {dimension_semantics = [#tpu.dimension_semantics<parallel>], iteration_bounds = array<i64: 1>, scalar_prefetch = 0 : i64, scratch_operands = 0 : i64, tpu.core_type = #tpu.core_type<tc>, window_params = [{transform_indices = @transform_0, window_bounds = array<i64: 8, 256>}, {transform_indices = @transform_1, window_bounds = array<i64: 8, 256>}, {transform_indices = @transform_2, window_bounds = array<i64: 8, 256>}, {transform_indices = @transform_3, window_bounds = array<i64: 8, 256>}]} {
    %c0 = arith.constant 0 : index
    %c0_0 = arith.constant 0 : index
    %0 = vector.load %arg1[%c0, %c0_0] : memref<8x256xf32, #tpu.memory_space<vmem>>, vector<8x256xf32>
    %c0_1 = arith.constant 0 : index
    %c0_2 = arith.constant 0 : index
    %1 = vector.load %arg2[%c0_1, %c0_2] : memref<8x256xf32, #tpu.memory_space<vmem>>, vector<8x256xf32>
    %2 = arith.subf %0, %1 : vector<8x256xf32>
    %cst = arith.constant 0.000000e+00 : f32
    %3 = vector.broadcast %cst : f32 to vector<8x256xf32>
    %4 = arith.addf %2, %3 : vector<8x256xf32>
    %cst_3 = arith.constant 0.00999999977 : f32
    %5 = vector.broadcast %cst_3 : f32 to vector<8x256xf32>
    %6 = arith.mulf %5, %4 : vector<8x256xf32>
    %7 = arith.addf %1, %6 : vector<8x256xf32>
    %cst_4 = arith.constant 1.000000e+00 : f32
    %8 = vector.broadcast %cst_4 : f32 to vector<8x256xf32>
    %9 = arith.cmpf oge, %7, %8 : vector<8x256xf32>
    %10 = arith.extui %9 : vector<8x256xi1> to vector<8x256xi32>
    %11 = arith.sitofp %10 : vector<8x256xi32> to vector<8x256xf32>
    %c0_5 = arith.constant 0 : index
    %c0_6 = arith.constant 0 : index
    %12 = vector.load %arg3[%c0_5, %c0_6] : memref<8x256xf32, #tpu.memory_space<vmem>>, vector<8x256xf32>
    tpu.vector_store %arg3[%c0_5, %c0_6], %11 {strides = array<i32>} : memref<8x256xf32, #tpu.memory_space<vmem>>, vector<8x256xf32>,
    %cst_7 = arith.constant 0.000000e+00 : f32
    %13 = vector.broadcast %cst_7 : f32 to vector<8x256xf32>
    %14 = arith.select %9, %13, %7 : vector<8x256xi1>, vector<8x256xf32>
    %c0_8 = arith.constant 0 : index
    %c0_9 = arith.constant 0 : index
    %15 = vector.load %arg4[%c0_8, %c0_9] : memref<8x256xf32, #tpu.memory_space<vmem>>, vector<8x256xf32>
    tpu.vector_store %arg4[%c0_8, %c0_9], %14 {strides = array<i32>} : memref<8x256xf32, #tpu.memory_space<vmem>>, vector<8x256xf32>,
    return
  }
  func.func @transform_0(%arg0: i32) -> (i32, i32) {
    %c0_i32 = arith.constant 0 : i32
    %c0_i32_0 = arith.constant 0 : i32
    return %arg0, %c0_i32 : i32, i32
  }
  func.func @transform_1(%arg0: i32) -> (i32, i32) {
    %c0_i32 = arith.constant 0 : i32
    %c0_i32_0 = arith.constant 0 : i32
    return %arg0, %c0_i32 : i32, i32
  }
  func.func @transform_2(%arg0: i32) -> (i32, i32) {
    %c0_i32 = arith.constant 0 : i32
    %c0_i32_0 = arith.constant 0 : i32
    return %arg0, %c0_i32 : i32, i32
  }
  func.func @transform_3(%arg0: i32) -> (i32, i32) {
    %c0_i32 = arith.constant 0 : i32
    %c0_i32_0 = arith.constant 0 : i32
    return %arg0, %c0_i32 : i32, i32
  }
}

</mosaic_0001>

<llo_original>
// kernel: tpu_custom_call.1
$region0: #{tpu_custom_call.1}
  #allocation0 [shape = 'u32[]', space=smem, size = 0x4, offset = 0x4, fixed_abs, tag = 'smem constant byte address 0x4 - core index']
  #allocation1 [shape = 'u32[72,128]{1,0:T(1,128)}', space=vmem, size = 0x9000, scoped, tag = 'internal scratch']
  %s0 = inlined_call_operand.vmem [shape: f32[8,256], index: 0, kind: input, shape index: {}]
  %s1 = inlined_call_operand.vmem [shape: f32[8,256], index: 1, kind: input, shape index: {}, may-alias: {1,3}]
  %s2 = inlined_call_operand.hbm [shape: f32[8,256], index: 2, kind: output, shape index: {0}]
  %s3 = inlined_call_operand.vmem [shape: f32[8,256], index: 3, kind: output, shape index: {1}, may-alias: {1,3}]
  %4 = xla_tuple %s2, %s3
  %s5 = sld [smem:[#allocation0]]
  $region26: #{tpu_custom_call.1} parent=0
    _
  %s7 = ssub.s32 1, %s5
  %s8 = scalar_select 0, %s7, %s5
  $region1: #{tpu_custom_call.1} parent=0
    #allocation2 [shape = 'u8[8192]{0}', space=vmem, size = 0x2000, scoped, tag = 'output window, operand 0, single buffered']
    #allocation3 [shape = 's32[1]{0}', space=sflag, size = 0x4, scoped, tag = 'scoped memory for tpu_custom_call.1']
    %9 = vsyncpa [#allocation3], 0
    // Predicated region
    $region2: #{tpu_custom_call.1} parent=1 // pred_check
      _
    $region3: #{tpu_custom_call.1} parent=1 // pred_check_branch
      %11 = sbr.rel (0) target = $region5
    $region4: #{tpu_custom_call.1} parent=1 // pred_region
      _
    $region5: #{tpu_custom_call.1} parent=1 // pred_fallthru
      _
    // Predicated region
    $region6: #{tpu_custom_call.1} parent=1 // pred_check
      _
    $region7: #{tpu_custom_call.1} parent=1 // pred_check_branch
      %13 = sbr.rel (0) target = $region9
    $region8: #{tpu_custom_call.1} parent=1 // pred_region
      _
    $region9: #{tpu_custom_call.1} parent=1 // pred_fallthru
      _
    %v14 = vld [vmem:[%s0] sm:$0xff]
    %v15 = vld [vmem:[%s0 + $0x8] sm:$0xff]
    %v16 = vld [vmem:[%s1] sm:$0xff]
    %v17 = vld [vmem:[%s1 + $0x8] sm:$0xff]
    %v18 = vsub.f32 %v14, %v16
    %v19 = vsub.f32 %v15, %v17
    %v20 = vadd.f32 %v18, 0.0
    %v21 = vadd.f32 %v19, 0.0
    %v22 = vmul.f32 %v20, 0.01
    %v23 = vmul.f32 %v21, 0.01
    %v24 = vadd.f32 %v16, %v22
    %v25 = vadd.f32 %v17, %v23
    %vm26 = vcmp.ge.f32.partialorder %v24, 1.0
    %vm27 = vcmp.ge.f32.partialorder %v25, 1.0
    %v28 = vsel %vm26, 1, 0
    %v29 = vsel %vm27, 1, 0
    %v30 = vcvt.s32.f32 %v28
    %v31 = vcvt.s32.f32 %v29
    %32 = vst [vmem:[#allocation2] sm:$0xff] %v30
    %33 = vst [vmem:[#allocation2 + $0x8] sm:$0xff] %v31
    %v34 = vsel %vm26, 0.0, %v24
    %v35 = vsel %vm27, 0.0, %v25
    %36 = vst [vmem:[%s3] sm:$0xff] %v34
    %37 = vst [vmem:[%s3 + $0x8] sm:$0xff] %v35
    // Predicated region
    $region10: #{tpu_custom_call.1} parent=1 // pred_check
      _
    $region11: #{tpu_custom_call.1} parent=1 // pred_check_branch
      %39 = sbr.rel (0) target = $region13
    $region12: #{tpu_custom_call.1} parent=1 // pred_region
      %41 = vsyncadd [#allocation3], 0
      %s43 = sshll.u32 [#allocation2], 4
      %s44 = int_to_ptr.vmem [resolvable:$true] %s43
      %s45 = sshll.u32 %s2, 4
      %s46 = int_to_ptr.hbm [resolvable:$true] %s45
      %48 = dma.vmem_to_hbm [thread:$0]  %s44, 256, %s46, [#allocation3]
    $region13: #{tpu_custom_call.1} parent=1 // pred_fallthru
      _
    // Predicated region
    $region14: #{tpu_custom_call.1} parent=1 // pred_check
      _
    $region15: #{tpu_custom_call.1} parent=1 // pred_check_branch
      %50 = sbr.rel (0) target = $region17
    $region16: #{tpu_custom_call.1} parent=1 // pred_region
      _
    $region17: #{tpu_custom_call.1} parent=1 // pred_fallthru
      _
    // Predicated region
    $region18: #{tpu_custom_call.1} parent=1 // pred_check
      _
    $region19: #{tpu_custom_call.1} parent=1 // pred_check_branch
      %52 = sbr.rel (0) target = $region21
    $region20: #{tpu_custom_call.1} parent=1 // pred_region
      %54 = dma.done [#allocation3], 256
    $region21: #{tpu_custom_call.1} parent=1 // pred_fallthru
      _
    // Predicated region
    $region22: #{tpu_custom_call.1} parent=1 // pred_check
      _
    $region23: #{tpu_custom_call.1} parent=1 // pred_check_branch
      %56 = sbr.rel (0) target = $region25
    $region24: #{tpu_custom_call.1} parent=1 // pred_region
      _
    $region25: #{tpu_custom_call.1} parent=1 // pred_fallthru
      _
    %57 = vsyncpa [#allocation3], 1

</llo_original>
